<compile_context>
chip_gen: v6e
topology: v6e:2x2x1
jax: 0.10.0
libtpu: 0.0.40
codegen_flags: <defaults>
</compile_context>

<pallas_src>
import functools

import jax
import jax.numpy as jnp
from jax.experimental import pallas as pl
from jax.experimental.pallas import tpu as pltpu

EPS = 1e-5


def subblock_kernel(x_ref, w0_ref, w12_ref, p_ref, o_ref, *, width):
    N, Cin, HW = x_ref.shape
    L = N * HW
    inv_cnt = 1.0 / float(L)

    w0 = w0_ref[...]                     # [Cout, Cin]
    w1 = w12_ref[0]                      # [Cout, 3*Cout]
    w2 = w12_ref[1]                      # [Cout, 3*Cout]
    pv = p_ref[...]                      # [Cout, 8] packed per-channel params
    b0 = pv[:, 0:1]
    g1 = pv[:, 1:2]
    bt1 = pv[:, 2:3]
    g2 = pv[:, 3:4]
    bt2 = pv[:, 4:5]

    # Fold batch into the lane axis: [Cin, N*HW].  Each x_ref[n] is 256 lanes,
    # so the concat is 128-aligned.
    x = jnp.concatenate([x_ref[n] for n in range(N)],
                        axis=1).astype(jnp.float32)

    # Width index of each lane position, for reflect boundaries.  HW is a
    # multiple of `width`, so every roll wrap across a row / batch boundary
    # lands exactly on a masked position.
    wl = jax.lax.broadcasted_iota(jnp.int32, (1, L), 1) % width
    is_first = wl == 0                   # w == 0
    is_last = wl == (width - 1)          # w == W-1

    def conv1x3(h, w_packed):
        # h: [C, L].  Taps via XLU rolls + boundary masks; no conv bias here —
        # a bias immediately before BatchNorm is canceled by mean subtraction.
        hm = pltpu.roll(h, 1, axis=1)        # h[..., w-1]
        hp = pltpu.roll(h, L - 1, axis=1)    # h[..., w+1]
        left = jnp.where(is_first, hp, hm)   # reflect: w=0 uses w=1
        right = jnp.where(is_last, hm, hp)   # reflect: w=W-1 uses w=W-2
        taps = jnp.concatenate([left, h, right], axis=0)      # [3C, L]
        return jnp.dot(w_packed, taps, preferred_element_type=jnp.float32)

    def batchnorm(h, g_col, bt_col):
        # Two-pass biased batch stats over (N, H, W) per channel.
        mean = jnp.sum(h, axis=1, keepdims=True) * inv_cnt    # [C, 1]
        d = h - mean
        var = jnp.sum(d * d, axis=1, keepdims=True) * inv_cnt
        scale = g_col * jax.lax.rsqrt(var + EPS)
        return d * scale + bt_col

    # conv_1x1 (+ bias) -> identity branch.  One [Cout, N*HW] tile.
    ident = jnp.dot(w0, x, preferred_element_type=jnp.float32) + b0

    h = conv1x3(ident, w1)
    h = batchnorm(h, g1, bt1)
    h = jnp.maximum(h, 0.0)              # ReLU
    h = conv1x3(h, w2)
    h = batchnorm(h, g2, bt2)
    y = h + ident                        # residual

    # Two aligned 256-lane slice stores (unmasked vst).
    for n in range(N):
        o_ref[n] = y[:, n * HW:(n + 1) * HW].astype(o_ref.dtype)


def sub_block_type_c(x_nchw, params):
    """x_nchw: [N, Cin, H, W] float32 -> [N, Cout, H, W] float32."""
    N, Cin, H, W = x_nchw.shape
    assert W >= 2, "reflect pad along width requires W >= 2"
    Cout = params["w0"].shape[1]
    HW = H * W

    # Free reshape (NCHW is already channel-major); no transpose needed.
    x = x_nchw.reshape(N, Cin, HW)

    # Pack weights: w0 -> [Cout, Cin]; 1x3 taps -> [Cout, 3*Cin] (tap-major K).
    w0t = jnp.transpose(params["w0"], (1, 0))

    def pack_w(w3):                                  # [3, Cin, Cout]
        c_in, c_out = w3.shape[1], w3.shape[2]
        return jnp.transpose(w3, (2, 0, 1)).reshape(c_out, 3 * c_in)

    w12 = jnp.stack([pack_w(params["w1"]), pack_w(params["w2"])], axis=0)

    # Pack the five per-channel vectors the kernel needs into one [Cout, 8]
    # array (b1/b2 are dropped: exactly canceled by the following BatchNorm).
    z = jnp.zeros_like(params["b0"])
    pv = jnp.stack([params["b0"], params["g1"], params["bt1"],
                    params["g2"], params["bt2"], z, z, z], axis=1)

    vmem = pl.BlockSpec(memory_space=pltpu.MemorySpace.VMEM)
    out = pl.pallas_call(
        functools.partial(subblock_kernel, width=W),
        out_shape=jax.ShapeDtypeStruct((N, Cout, HW), jnp.float32),
        in_specs=[vmem, vmem, vmem, vmem],
        out_specs=vmem,
    )(x, w0t, w12, pv)

    return out.reshape(N, Cout, H, W)


def reference(x_nchw, params):
    """Independent pure-JAX reference in NCHW (mirrors the PyTorch forward,
    including the BN-canceled conv biases b1/b2)."""
    w0 = params["w0"]
    h = jnp.einsum('nchw,cd->ndhw', x_nchw, w0) + params["b0"][None, :, None, None]
    identity = h

    def conv_bn(h, w3, b, g, bt):
        hp = jnp.pad(h, ((0, 0), (0, 0), (0, 0), (1, 1)), mode='reflect')
        W_ = h.shape[3]
        c = sum(jnp.einsum('nchw,cd->ndhw', hp[:, :, :, k:k + W_], w3[k])
                for k in range(3)) + b[None, :, None, None]
        mean = jnp.mean(c, axis=(0, 2, 3), keepdims=True)
        var = jnp.mean((c - mean) ** 2, axis=(0, 2, 3), keepdims=True)
        return (c - mean) * jax.lax.rsqrt(var + EPS) * g[None, :, None, None] \
            + bt[None, :, None, None]

    h = conv_bn(h, params["w1"], params["b1"], params["g1"], params["bt1"])
    h = jnp.maximum(h, 0.0)
    h = conv_bn(h, params["w2"], params["b2"], params["g2"], params["bt2"])
    return h + identity


if __name__ == "__main__":
    # Module config: in_chs=4, out_chs=8, krnl_size=(1,3), activ='relu'
    N, Cin, H, W = 2, 4, 16, 16
    Cout = 8
    key = jax.random.PRNGKey(0)
    ks = jax.random.split(key, 11)
    params = {
        "w0": 0.2 * jax.random.normal(ks[0], (Cin, Cout), jnp.float32),
        "b0": 0.1 * jax.random.normal(ks[1], (Cout,), jnp.float32),
        "w1": 0.2 * jax.random.normal(ks[2], (3, Cout, Cout), jnp.float32),
        "b1": 0.1 * jax.random.normal(ks[3], (Cout,), jnp.float32),
        "g1": 1.0 + 0.1 * jax.random.normal(ks[4], (Cout,), jnp.float32),
        "bt1": 0.1 * jax.random.normal(ks[5], (Cout,), jnp.float32),
        "w2": 0.2 * jax.random.normal(ks[6], (3, Cout, Cout), jnp.float32),
        "b2": 0.1 * jax.random.normal(ks[7], (Cout,), jnp.float32),
        "g2": 1.0 + 0.1 * jax.random.normal(ks[8], (Cout,), jnp.float32),
        "bt2": 0.1 * jax.random.normal(ks[9], (Cout,), jnp.float32),
    }
    x = jax.random.normal(ks[10], (N, Cin, H, W), jnp.float32)

    fn = jax.jit(sub_block_type_c)
    out = jax.block_until_ready(fn(x, params))
    ref = jax.block_until_ready(reference(x, params))
    assert out.shape == (N, Cout, H, W)
    assert jnp.allclose(out, ref, rtol=1e-4, atol=1e-4), \
        float(jnp.max(jnp.abs(out - ref)))
    print("KERNEL_OK")
</pallas_src>

<mosaic_0001>
module attributes {stable_mosaic.version = 11 : i64} {
  func.func @subblock_kernel(%arg0: memref<2x4x256xf32, #tpu.memory_space<vmem>>, %arg1: memref<8x4xf32, #tpu.memory_space<vmem>>, %arg2: memref<2x8x24xf32, #tpu.memory_space<vmem>>, %arg3: memref<8x8xf32, #tpu.memory_space<vmem>>, %arg4: memref<2x8x256xf32, #tpu.memory_space<vmem>>) attributes {dimension_semantics = [], scalar_prefetch = 0 : i64, scratch_operands = 0 : i64, tpu.core_type = #tpu.core_type<tc>} {
    %c0 = arith.constant 0 : index
    %c0_0 = arith.constant 0 : index
    %0 = vector.load %arg1[%c0, %c0_0] : memref<8x4xf32, #tpu.memory_space<vmem>>, vector<8x4xf32>
    %c0_1 = arith.constant 0 : index
    %c0_2 = arith.constant 0 : index
    %c0_3 = arith.constant 0 : index
    %1 = vector.load %arg2[%c0_1, %c0_2, %c0_3] : memref<2x8x24xf32, #tpu.memory_space<vmem>>, vector<1x8x24xf32>
    %2 = vector.shape_cast %1 : vector<1x8x24xf32> to vector<8x24xf32>
    %c1 = arith.constant 1 : index
    %c0_4 = arith.constant 0 : index
    %c0_5 = arith.constant 0 : index
    %3 = vector.load %arg2[%c1, %c0_4, %c0_5] : memref<2x8x24xf32, #tpu.memory_space<vmem>>, vector<1x8x24xf32>
    %4 = vector.shape_cast %3 : vector<1x8x24xf32> to vector<8x24xf32>
    %c0_6 = arith.constant 0 : index
    %c0_7 = arith.constant 0 : index
    %5 = vector.load %arg3[%c0_6, %c0_7] : memref<8x8xf32, #tpu.memory_space<vmem>>, vector<8x8xf32>
    %6 = vector.extract_strided_slice %5 {offsets = [0, 0], sizes = [8, 1], strides = [1, 1]} : vector<8x8xf32> to vector<8x1xf32>
    %7 = vector.extract_strided_slice %5 {offsets = [0, 1], sizes = [8, 1], strides = [1, 1]} : vector<8x8xf32> to vector<8x1xf32>
    %8 = vector.extract_strided_slice %5 {offsets = [0, 2], sizes = [8, 1], strides = [1, 1]} : vector<8x8xf32> to vector<8x1xf32>
    %9 = vector.extract_strided_slice %5 {offsets = [0, 3], sizes = [8, 1], strides = [1, 1]} : vector<8x8xf32> to vector<8x1xf32>
    %10 = vector.extract_strided_slice %5 {offsets = [0, 4], sizes = [8, 1], strides = [1, 1]} : vector<8x8xf32> to vector<8x1xf32>
    %c0_8 = arith.constant 0 : index
    %c0_9 = arith.constant 0 : index
    %c0_10 = arith.constant 0 : index
    %11 = vector.load %arg0[%c0_8, %c0_9, %c0_10] : memref<2x4x256xf32, #tpu.memory_space<vmem>>, vector<1x4x256xf32>
    %12 = vector.shape_cast %11 : vector<1x4x256xf32> to vector<4x256xf32>
    %c1_11 = arith.constant 1 : index
    %c0_12 = arith.constant 0 : index
    %c0_13 = arith.constant 0 : index
    %13 = vector.load %arg0[%c1_11, %c0_12, %c0_13] : memref<2x4x256xf32, #tpu.memory_space<vmem>>, vector<1x4x256xf32>
    %14 = vector.shape_cast %13 : vector<1x4x256xf32> to vector<4x256xf32>
    %15 = tpu.concatenate %12, %14 in 1 : vector<4x256xf32>, vector<4x256xf32> -> vector<4x512xf32>
    %16 = tpu.iota {dimensions = array<i32: 1>} : vector<1x512xi32>
    %c16_i32 = arith.constant 16 : i32
    %c0_i32 = arith.constant 0 : i32
    %17 = arith.cmpi eq, %c16_i32, %c0_i32 : i32
    %c1_i32 = arith.constant 1 : i32
    %18 = arith.select %17, %c1_i32, %c16_i32 : i32
    %19 = vector.broadcast %18 : i32 to vector<1x512xi32>
    %20 = arith.remsi %16, %19 : vector<1x512xi32>
    %c0_i32_14 = arith.constant 0 : i32
    %21 = vector.broadcast %c0_i32_14 : i32 to vector<1x512xi32>
    %22 = arith.cmpi ne, %20, %21 : vector<1x512xi32>
    %c0_i32_15 = arith.constant 0 : i32
    %23 = vector.broadcast %c0_i32_15 : i32 to vector<1x512xi32>
    %24 = arith.cmpi slt, %20, %23 : vector<1x512xi32>
    %c0_i32_16 = arith.constant 0 : i32
    %25 = arith.cmpi slt, %18, %c0_i32_16 : i32
    %26 = vector.broadcast %25 : i1 to vector<1x512xi1>
    %27 = vector.broadcast %26 : vector<1x512xi1> to vector<1x512xi1>
    %28 = arith.xori %24, %27 : vector<1x512xi1>
    %29 = arith.andi %28, %22 : vector<1x512xi1>
    %30 = vector.broadcast %18 : i32 to vector<1x512xi32>
    %31 = arith.addi %20, %30 : vector<1x512xi32>
    %32 = arith.select %29, %31, %20 : vector<1x512xi1>, vector<1x512xi32>
    %c0_i32_17 = arith.constant 0 : i32
    %33 = vector.broadcast %c0_i32_17 : i32 to vector<1x512xi32>
    %34 = arith.cmpi eq, %32, %33 : vector<1x512xi32>
    %c15_i32 = arith.constant 15 : i32
    %35 = vector.broadcast %c15_i32 : i32 to vector<1x512xi32>
    %36 = arith.cmpi eq, %32, %35 : vector<1x512xi32>
    %cst = arith.constant dense<0.000000e+00> : vector<8x512xf32>
    %37 = tpu.matmul %0, %15, %cst {dimension_numbers = #tpu.dot_dimension_numbers<[1], [0], [0], [1], [0, 0, 1, 1], [], []>} : vector<8x4xf32>, vector<4x512xf32>, vector<8x512xf32> -> vector<8x512xf32>
    %38 = vector.broadcast %6 : vector<8x1xf32> to vector<8x512xf32>
    %39 = arith.addf %37, %38 : vector<8x512xf32>
    %c1_i32_18 = arith.constant 1 : i32
    %40 = tpu.dynamic_rotate %39 by %c1_i32_18 dim 1 : vector<8x512xf32>, i32 -> vector<8x512xf32>
    %c511_i32 = arith.constant 511 : i32
    %41 = tpu.dynamic_rotate %39 by %c511_i32 dim 1 : vector<8x512xf32>, i32 -> vector<8x512xf32>
    %42 = vector.shape_cast %34 : vector<1x512xi1> to vector<1x512xi1>
    %43 = vector.broadcast %42 : vector<1x512xi1> to vector<8x512xi1>
    %44 = arith.select %43, %41, %40 : vector<8x512xi1>, vector<8x512xf32>
    %45 = vector.shape_cast %36 : vector<1x512xi1> to vector<1x512xi1>
    %46 = vector.broadcast %45 : vector<1x512xi1> to vector<8x512xi1>
    %47 = arith.select %46, %40, %41 : vector<8x512xi1>, vector<8x512xf32>
    %48 = tpu.concatenate %44, %39, %47 in 0 : vector<8x512xf32>, vector<8x512xf32>, vector<8x512xf32> -> vector<24x512xf32>
    %cst_19 = arith.constant dense<0.000000e+00> : vector<8x512xf32>
    %49 = tpu.matmul %2, %48, %cst_19 {dimension_numbers = #tpu.dot_dimension_numbers<[1], [0], [0], [1], [0, 0, 1, 1], [], []>} : vector<8x24xf32>, vector<24x512xf32>, vector<8x512xf32> -> vector<8x512xf32>
    %cst_20 = arith.constant dense<0.000000e+00> : vector<8xf32>
    %50 = vector.multi_reduction <add>, %49, %cst_20 [1] : vector<8x512xf32> to vector<8xf32>
    %51 = vector.shape_cast %50 : vector<8xf32> to vector<8x1xf32>
    %cst_21 = arith.constant 0.001953125 : f32
    %52 = vector.broadcast %cst_21 : f32 to vector<8x1xf32>
    %53 = arith.mulf %51, %52 : vector<8x1xf32>
    %54 = vector.broadcast %53 : vector<8x1xf32> to vector<8x512xf32>
    %55 = arith.subf %49, %54 : vector<8x512xf32>
    %56 = arith.mulf %55, %55 : vector<8x512xf32>
    %cst_22 = arith.constant dense<0.000000e+00> : vector<8xf32>
    %57 = vector.multi_reduction <add>, %56, %cst_22 [1] : vector<8x512xf32> to vector<8xf32>
    %58 = vector.shape_cast %57 : vector<8xf32> to vector<8x1xf32>
    %cst_23 = arith.constant 0.001953125 : f32
    %59 = vector.broadcast %cst_23 : f32 to vector<8x1xf32>
    %60 = arith.mulf %58, %59 : vector<8x1xf32>
    %cst_24 = arith.constant 9.99999974E-6 : f32
    %61 = vector.broadcast %cst_24 : f32 to vector<8x1xf32>
    %62 = arith.addf %60, %61 : vector<8x1xf32>
    %63 = math.rsqrt %62 : vector<8x1xf32>
    %64 = arith.mulf %7, %63 : vector<8x1xf32>
    %65 = vector.broadcast %64 : vector<8x1xf32> to vector<8x512xf32>
    %66 = arith.mulf %55, %65 : vector<8x512xf32>
    %67 = vector.broadcast %8 : vector<8x1xf32> to vector<8x512xf32>
    %68 = arith.addf %66, %67 : vector<8x512xf32>
    %cst_25 = arith.constant 0.000000e+00 : f32
    %69 = vector.broadcast %cst_25 : f32 to vector<8x512xf32>
    %70 = arith.maximumf %68, %69 : vector<8x512xf32>
    %c1_i32_26 = arith.constant 1 : i32
    %71 = tpu.dynamic_rotate %70 by %c1_i32_26 dim 1 : vector<8x512xf32>, i32 -> vector<8x512xf32>
    %c511_i32_27 = arith.constant 511 : i32
    %72 = tpu.dynamic_rotate %70 by %c511_i32_27 dim 1 : vector<8x512xf32>, i32 -> vector<8x512xf32>
    %73 = vector.shape_cast %34 : vector<1x512xi1> to vector<1x512xi1>
    %74 = vector.broadcast %73 : vector<1x512xi1> to vector<8x512xi1>
    %75 = arith.select %74, %72, %71 : vector<8x512xi1>, vector<8x512xf32>
    %76 = vector.shape_cast %36 : vector<1x512xi1> to vector<1x512xi1>
    %77 = vector.broadcast %76 : vector<1x512xi1> to vector<8x512xi1>
    %78 = arith.select %77, %71, %72 : vector<8x512xi1>, vector<8x512xf32>
    %79 = tpu.concatenate %75, %70, %78 in 0 : vector<8x512xf32>, vector<8x512xf32>, vector<8x512xf32> -> vector<24x512xf32>
    %cst_28 = arith.constant dense<0.000000e+00> : vector<8x512xf32>
    %80 = tpu.matmul %4, %79, %cst_28 {dimension_numbers = #tpu.dot_dimension_numbers<[1], [0], [0], [1], [0, 0, 1, 1], [], []>} : vector<8x24xf32>, vector<24x512xf32>, vector<8x512xf32> -> vector<8x512xf32>
    %cst_29 = arith.constant dense<0.000000e+00> : vector<8xf32>
    %81 = vector.multi_reduction <add>, %80, %cst_29 [1] : vector<8x512xf32> to vector<8xf32>
    %82 = vector.shape_cast %81 : vector<8xf32> to vector<8x1xf32>
    %cst_30 = arith.constant 0.001953125 : f32
    %83 = vector.broadcast %cst_30 : f32 to vector<8x1xf32>
    %84 = arith.mulf %82, %83 : vector<8x1xf32>
    %85 = vector.broadcast %84 : vector<8x1xf32> to vector<8x512xf32>
    %86 = arith.subf %80, %85 : vector<8x512xf32>
    %87 = arith.mulf %86, %86 : vector<8x512xf32>
    %cst_31 = arith.constant dense<0.000000e+00> : vector<8xf32>
    %88 = vector.multi_reduction <add>, %87, %cst_31 [1] : vector<8x512xf32> to vector<8xf32>
    %89 = vector.shape_cast %88 : vector<8xf32> to vector<8x1xf32>
    %cst_32 = arith.constant 0.001953125 : f32
    %90 = vector.broadcast %cst_32 : f32 to vector<8x1xf32>
    %91 = arith.mulf %89, %90 : vector<8x1xf32>
    %cst_33 = arith.constant 9.99999974E-6 : f32
    %92 = vector.broadcast %cst_33 : f32 to vector<8x1xf32>
    %93 = arith.addf %91, %92 : vector<8x1xf32>
    %94 = math.rsqrt %93 : vector<8x1xf32>
    %95 = arith.mulf %9, %94 : vector<8x1xf32>
    %96 = vector.broadcast %95 : vector<8x1xf32> to vector<8x512xf32>
    %97 = arith.mulf %86, %96 : vector<8x512xf32>
    %98 = vector.broadcast %10 : vector<8x1xf32> to vector<8x512xf32>
    %99 = arith.addf %97, %98 : vector<8x512xf32>
    %100 = arith.addf %99, %39 : vector<8x512xf32>
    %101 = vector.extract_strided_slice %100 {offsets = [0, 0], sizes = [8, 256], strides = [1, 1]} : vector<8x512xf32> to vector<8x256xf32>
    %c0_34 = arith.constant 0 : index
    %c0_35 = arith.constant 0 : index
    %c0_36 = arith.constant 0 : index
    %102 = vector.load %arg4[%c0_34, %c0_35, %c0_36] : memref<2x8x256xf32, #tpu.memory_space<vmem>>, vector<1x8x256xf32>
    %103 = vector.shape_cast %102 : vector<1x8x256xf32> to vector<8x256xf32>
    %104 = vector.shape_cast %101 : vector<8x256xf32> to vector<1x8x256xf32>
    tpu.vector_store %arg4[%c0_34, %c0_35, %c0_36], %104 {strides = array<i32>} : memref<2x8x256xf32, #tpu.memory_space<vmem>>, vector<1x8x256xf32>,
    %105 = vector.extract_strided_slice %100 {offsets = [0, 256], sizes = [8, 256], strides = [1, 1]} : vector<8x512xf32> to vector<8x256xf32>
    %c1_37 = arith.constant 1 : index
    %c0_38 = arith.constant 0 : index
    %c0_39 = arith.constant 0 : index
    %106 = vector.load %arg4[%c1_37, %c0_38, %c0_39] : memref<2x8x256xf32, #tpu.memory_space<vmem>>, vector<1x8x256xf32>
    %107 = vector.shape_cast %106 : vector<1x8x256xf32> to vector<8x256xf32>
    %108 = vector.shape_cast %105 : vector<8x256xf32> to vector<1x8x256xf32>
    tpu.vector_store %arg4[%c1_37, %c0_38, %c0_39], %108 {strides = array<i32>} : memref<2x8x256xf32, #tpu.memory_space<vmem>>, vector<1x8x256xf32>,
    return
  }
}

</mosaic_0001>

<llo_original>
// kernel: sub_block_type_c.1
$region0: #{sub_block_type_c.1}
  #allocation0 [shape = 'u32[]', space=smem, size = 0x4, offset = 0x4, fixed_abs, tag = 'smem constant byte address 0x4 - core index']
  #allocation1 [shape = 'u32[144,128]{1,0:T(1,128)}', space=vmem, size = 0x12000, scoped, tag = 'internal scratch']
  %s0 = inlined_call_operand.vmem [shape: f32[2,4,256], index: 0, kind: input, shape index: {}]
  %s1 = inlined_call_operand.vmem [shape: f32[8,4], index: 1, kind: input, shape index: {}]
  %s2 = inlined_call_operand.vmem [shape: f32[2,8,24], index: 2, kind: input, shape index: {}]
  %s3 = inlined_call_operand.vmem [shape: f32[8,8], index: 3, kind: input, shape index: {}]
  %s4 = inlined_call_operand.vmem [shape: f32[2,8,256], index: 4, kind: output, shape index: {}]
  %s5 = sld [smem:[#allocation0]]
  $region26: #{sub_block_type_c.1} parent=0
    _
  %s7 = ssub.s32 1, %s5
  %s8 = scalar_select 0, %s7, %s5
  // Predicated region
  $region2: #{sub_block_type_c.1} parent=0 // pred_check
    _
  $region3: #{sub_block_type_c.1} parent=0 // pred_check_branch
    %10 = sbr.rel (0) target = $region5
  $region4: #{sub_block_type_c.1} parent=0 // pred_region
    _
  $region5: #{sub_block_type_c.1} parent=0 // pred_fallthru
    _
  // Predicated region
  $region6: #{sub_block_type_c.1} parent=0 // pred_check
    _
  $region7: #{sub_block_type_c.1} parent=0 // pred_check_branch
    %12 = sbr.rel (0) target = $region9
  $region8: #{sub_block_type_c.1} parent=0 // pred_region
    _
  $region9: #{sub_block_type_c.1} parent=0 // pred_fallthru
    _
  // Predicated region
  $region10: #{sub_block_type_c.1} parent=0 // pred_check
    _
  $region11: #{sub_block_type_c.1} parent=0 // pred_check_branch
    %14 = sbr.rel (0) target = $region13
  $region12: #{sub_block_type_c.1} parent=0 // pred_region
    _
  $region13: #{sub_block_type_c.1} parent=0 // pred_fallthru
    _
  // Predicated region
  $region14: #{sub_block_type_c.1} parent=0 // pred_check
    _
  $region15: #{sub_block_type_c.1} parent=0 // pred_check_branch
    %16 = sbr.rel (0) target = $region17
  $region16: #{sub_block_type_c.1} parent=0 // pred_region
    _
  $region17: #{sub_block_type_c.1} parent=0 // pred_fallthru
    _
  %v17 = vld [vmem:[%s1] sm:$0xff]
  %v18 = vld [vmem:[%s2] sm:$0xff]
  %s19 = scalar_lea.vmem %s2, 8
  %v20 = vld [vmem:[%s19] sm:$0xff]
  %v21 = vld [vmem:[%s3] sm:$0xff]
  %v22 = vld [vmem:[%s0] sm:$0xff]
  %s23 = scalar_lea.vmem %s0, 8
  %v24 = vld [vmem:[%s23] sm:$0xff]
  %v26 = vcombine.high %v22, %v22
  %v28 = vcombine.high %v24, %v24
  %v29 = vlaneseq
  %v30 = vand.u32 %v29, 127
  %v31 = vadd.s32 %v30, 128
  %v32 = vadd.s32 %v30, 256
  %v33 = vadd.s32 %v30, 384
  %vm34 = vcmp.lt.s32.totalorder %v30, 0
  %v35 = vsub.s32 0, %v30
  %v36 = vsel %vm34, %v35, %v30
  %v37 = vshrl.u32 %v36, 4
  %v38 = vand.u32 %v36, 15
  %v39 = vsub.s32 0, %v38
  %v40 = vsel %vm34, %v39, %v38
  %vm41 = vcmp.lt.s32.totalorder %v31, 0
  %v42 = vsub.s32 0, %v31
  %v43 = vsel %vm41, %v42, %v31
  %v44 = vshrl.u32 %v43, 4
  %v45 = vand.u32 %v43, 15
  %v46 = vsub.s32 0, %v45
  %v47 = vsel %vm41, %v46, %v45
  %vm48 = vcmp.lt.s32.totalorder %v32, 0
  %v49 = vsub.s32 0, %v32
  %v50 = vsel %vm48, %v49, %v32
  %v51 = vshrl.u32 %v50, 4
  %v52 = vand.u32 %v50, 15
  %v53 = vsub.s32 0, %v52
  %v54 = vsel %vm48, %v53, %v52
  %vm55 = vcmp.lt.s32.totalorder %v33, 0
  %v56 = vsub.s32 0, %v33
  %v57 = vsel %vm55, %v56, %v33
  %v58 = vshrl.u32 %v57, 4
  %v59 = vand.u32 %v57, 15
  %v60 = vsub.s32 0, %v59
  %v61 = vsel %vm55, %v60, %v59
  %vm62 = vcmp.ne.s32.totalorder %v40, 0
  %vm63 = vcmp.ne.s32.totalorder %v47, 0
  %vm64 = vcmp.ne.s32.totalorder %v54, 0
  %vm65 = vcmp.ne.s32.totalorder %v61, 0
  %vm66 = vcmp.lt.s32.totalorder %v40, 0
  %vm67 = vcmp.lt.s32.totalorder %v47, 0
  %vm68 = vcmp.lt.s32.totalorder %v54, 0
  %vm69 = vcmp.lt.s32.totalorder %v61, 0
  %vm70 = vmand %vm66, %vm62
  %vm71 = vmand %vm67, %vm63
  %vm72 = vmand %vm68, %vm64
  %vm73 = vmand %vm69, %vm65
  %v74 = vadd.s32 %v40, 16
  %v75 = vadd.s32 %v47, 16
  %v76 = vadd.s32 %v54, 16
  %v77 = vadd.s32 %v61, 16
  %v78 = vsel %vm70, %v74, %v40
  %v79 = vsel %vm71, %v75, %v47
  %v80 = vsel %vm72, %v76, %v54
  %v81 = vsel %vm73, %v77, %v61
  %vm82 = vcmp.eq.s32.totalorder %v78, 0
  %vm83 = vcmp.eq.s32.totalorder %v79, 0
  %vm84 = vcmp.eq.s32.totalorder %v80, 0
  %vm85 = vcmp.eq.s32.totalorder %v81, 0
  %vm86 = vcmp.eq.s32.totalorder %v78, 15
  %vm87 = vcmp.eq.s32.totalorder %v79, 15
  %vm88 = vcmp.eq.s32.totalorder %v80, 15
  %vm89 = vcmp.eq.s32.totalorder %v81, 15
  %91 = vset.pattern.permute.xlu0 0
  %92 = vperm.xlu0 %91, %v21
  %v93 = vpop.permute.xlu0 %92
  %vm95 = vcmask 31744
  %v97 = vsel %vm95, %v17, 0
  %vm99 = vcmask 1043456
  %v100 = vsel %vm99, %v22, 0
  %v102 = vsel %vm99, %v26, 0
  %v104 = vsel %vm99, %v24, 0
  %v106 = vsel %vm99, %v28, 0
  %108 = vmatprep.subr.mxu0 0.0
  %109 = vmatpush1.msra.mxu0 0.0
  %110 = vmatprep.subr.mxu0 0.0
  %111 = vmatpush1.msra.mxu0 0.0
  %112 = vmatprep.subr.mxu0 0.0
  %113 = vmatpush1.msra.mxu0 0.0
  %114 = vmatprep.subr.mxu0 0.0
  %115 = vmatpush1.msra.mxu0 0.0
  %116 = vmatprep.subr.mxu0 0.0
  %117 = vmatpush1.msra.mxu0 0.0
  %118 = vmatprep.subr.mxu0 0.0
  %119 = vmatpush1.msra.mxu0 0.0
  %120 = vmatprep.subr.mxu0 0.0
  %121 = vmatpush1.msra.mxu0 0.0
  %122 = vmatprep.subr.mxu0 0.0
  %123 = vmatpush1.msra.mxu0 0.0
  %124 = vmatprep.subr.mxu0 0.0
  %125 = vmatpush1.msra.mxu0 0.0
  %126 = vmatprep.subr.mxu0 0.0
  %127 = vmatpush1.msra.mxu0 0.0
  %128 = vmatprep.subr.mxu0 0.0
  %129 = vmatpush1.msra.mxu0 0.0
  %130 = vmatprep.subr.mxu0 0.0
  %131 = vmatpush1.msra.mxu0 0.0
  %132 = vmatprep.subr.mxu0 0.0
  %133 = vmatpush1.msra.mxu0 0.0
  %134 = vmatprep.subr.mxu0 0.0
  %135 = vmatpush1.msra.mxu0 0.0
  %136 = vmatprep.subr.mxu0 0.0
  %137 = vmatpush1.msra.mxu0 0.0
  %138 = vmatprep.subr.mxu0 %v102
  %139 = vmatpush1.msra.mxu0 %v100
  %140 = vmatprep.subr.mxu0 0.0
  %141 = vmatpush2.msra.mxu0 0.0
  %142 = vmatprep.subr.mxu0 0.0
  %143 = vmatpush2.msra.mxu0 0.0
  %144 = vmatprep.subr.mxu0 0.0
  %145 = vmatpush2.msra.mxu0 0.0
  %146 = vmatprep.subr.mxu0 0.0
  %147 = vmatpush2.msra.mxu0 0.0
  %148 = vmatprep.subr.mxu0 0.0
  %149 = vmatpush2.msra.mxu0 0.0
  %150 = vmatprep.subr.mxu0 0.0
  %151 = vmatpush2.msra.mxu0 0.0
  %152 = vmatprep.subr.mxu0 0.0
  %153 = vmatpush2.msra.mxu0 0.0
  %154 = vmatprep.subr.mxu0 0.0
  %155 = vmatpush2.msra.mxu0 0.0
  %156 = vmatprep.subr.mxu0 0.0
  %157 = vmatpush2.msra.mxu0 0.0
  %158 = vmatprep.subr.mxu0 0.0
  %159 = vmatpush2.msra.mxu0 0.0
  %160 = vmatprep.subr.mxu0 0.0
  %161 = vmatpush2.msra.mxu0 0.0
  %162 = vmatprep.subr.mxu0 0.0
  %163 = vmatpush2.msra.mxu0 0.0
  %164 = vmatprep.subr.mxu0 0.0
  %165 = vmatpush2.msra.mxu0 0.0
  %166 = vmatprep.subr.mxu0 0.0
  %167 = vmatpush2.msra.mxu0 0.0
  %168 = vmatprep.subr.mxu0 0.0
  %169 = vmatpush2.msra.mxu0 0.0
  %170 = vmatprep.subr.mxu0 0.0
  %171 = vmatpush2.msra.mxu0 0.0
  %172 = vmatprep.mubr.f32.mxu0 0.0
  %173 = vmatmul.mubr.f32.gmra.mxu0 %v97
  %v174 = vpop.f32.mrf.mxu0
  %v175 = vadd.f32 %v93, %v174
  %v176 = vpop.f32.mrf.mxu0
  %v177 = vadd.f32 %v93, %v176
  %178 = vdwg.mxu0
  %179 = vmatprep.subr.mxu0 0.0
  %180 = vmatpush1.msra.mxu0 0.0
  %181 = vmatprep.subr.mxu0 0.0
  %182 = vmatpush1.msra.mxu0 0.0
  %183 = vmatprep.subr.mxu0 0.0
  %184 = vmatpush1.msra.mxu0 0.0
  %185 = vmatprep.subr.mxu0 0.0
  %186 = vmatpush1.msra.mxu0 0.0
  %187 = vmatprep.subr.mxu0 0.0
  %188 = vmatpush1.msra.mxu0 0.0
  %189 = vmatprep.subr.mxu0 0.0
  %190 = vmatpush1.msra.mxu0 0.0
  %191 = vmatprep.subr.mxu0 0.0
  %192 = vmatpush1.msra.mxu0 0.0
  %193 = vmatprep.subr.mxu0 0.0
  %194 = vmatpush1.msra.mxu0 0.0
  %195 = vmatprep.subr.mxu0 0.0
  %196 = vmatpush1.msra.mxu0 0.0
  %197 = vmatprep.subr.mxu0 0.0
  %198 = vmatpush1.msra.mxu0 0.0
  %199 = vmatprep.subr.mxu0 0.0
  %200 = vmatpush1.msra.mxu0 0.0
  %201 = vmatprep.subr.mxu0 0.0
  %202 = vmatpush1.msra.mxu0 0.0
  %203 = vmatprep.subr.mxu0 0.0
  %204 = vmatpush1.msra.mxu0 0.0
  %205 = vmatprep.subr.mxu0 0.0
  %206 = vmatpush1.msra.mxu0 0.0
  %207 = vmatprep.subr.mxu0 0.0
  %208 = vmatpush1.msra.mxu0 0.0
  %209 = vmatprep.subr.mxu0 %v106
  %210 = vmatpush1.msra.mxu0 %v104
  %211 = vmatprep.subr.mxu0 0.0
  %212 = vmatpush2.msra.mxu0 0.0
  %213 = vmatprep.subr.mxu0 0.0
  %214 = vmatpush2.msra.mxu0 0.0
  %215 = vmatprep.subr.mxu0 0.0
  %216 = vmatpush2.msra.mxu0 0.0
  %217 = vmatprep.subr.mxu0 0.0
  %218 = vmatpush2.msra.mxu0 0.0
  %219 = vmatprep.subr.mxu0 0.0
  %220 = vmatpush2.msra.mxu0 0.0
  %221 = vmatprep.subr.mxu0 0.0
  %222 = vmatpush2.msra.mxu0 0.0
  %223 = vmatprep.subr.mxu0 0.0
  %224 = vmatpush2.msra.mxu0 0.0
  %225 = vmatprep.subr.mxu0 0.0
  %226 = vmatpush2.msra.mxu0 0.0
  %227 = vmatprep.subr.mxu0 0.0
  %228 = vmatpush2.msra.mxu0 0.0
  %229 = vmatprep.subr.mxu0 0.0
  %230 = vmatpush2.msra.mxu0 0.0
  %231 = vmatprep.subr.mxu0 0.0
  %232 = vmatpush2.msra.mxu0 0.0
  %233 = vmatprep.subr.mxu0 0.0
  %234 = vmatpush2.msra.mxu0 0.0
  %235 = vmatprep.subr.mxu0 0.0
  %236 = vmatpush2.msra.mxu0 0.0
  %237 = vmatprep.subr.mxu0 0.0
  %238 = vmatpush2.msra.mxu0 0.0
  %239 = vmatprep.subr.mxu0 0.0
  %240 = vmatpush2.msra.mxu0 0.0
  %241 = vmatprep.subr.mxu0 0.0
  %242 = vmatpush2.msra.mxu0 0.0
  %243 = vmatprep.mubr.f32.mxu0 0.0
  %244 = vmatmul.mubr.f32.gmra.mxu0 %v97
  %v245 = vpop.f32.mrf.mxu0
  %v246 = vadd.f32 %v93, %v245
  %v247 = vpop.f32.mrf.mxu0
  %v248 = vadd.f32 %v93, %v247
  %249 = vdwg.mxu0
  %250 = vrot.lane.b32.xlu0 %v175, 1
  %v251 = vpop.permute.xlu0 %250
  %252 = vrot.lane.b32.xlu0 %v177, 1
  %v253 = vpop.permute.xlu0 %252
  %254 = vrot.lane.b32.xlu0 %v246, 1
  %v255 = vpop.permute.xlu0 %254
  %256 = vrot.lane.b32.xlu0 %v248, 1
  %v257 = vpop.permute.xlu0 %256
  %vm258 = vcmp.lt.s32.totalorder %v30, 1
  %v259 = vsel %vm258, %v255, %v257
  %v260 = vsel %vm258, %v253, %v255
  %v261 = vsel %vm258, %v251, %v253
  %v262 = vsel %vm258, %v257, %v251
  %263 = vrot.lane.b32.xlu0 %v175, 127
  %v264 = vpop.permute.xlu0 %263
  %265 = vrot.lane.b32.xlu0 %v177, 127
  %v266 = vpop.permute.xlu0 %265
  %267 = vrot.lane.b32.xlu0 %v246, 127
  %v268 = vpop.permute.xlu0 %267
  %269 = vrot.lane.b32.xlu0 %v248, 127
  %v270 = vpop.permute.xlu0 %269
  %vm271 = vcmp.lt.s32.totalorder %v30, 127
  %v272 = vsel %vm271, %v268, %v270
  %v273 = vsel %vm271, %v266, %v268
  %v274 = vsel %vm271, %v264, %v266
  %v275 = vsel %vm271, %v270, %v264
  %v276 = vsel %vm82, 1, 0
  %v277 = vsel %vm83, 1, 0
  %v278 = vsel %vm84, 1, 0
  %v279 = vsel %vm85, 1, 0
  %vm280 = vcmp.eq.s32.totalorder %v276, 1
  %vm281 = vcmp.eq.s32.totalorder %v277, 1
  %vm282 = vcmp.eq.s32.totalorder %v278, 1
  %vm283 = vcmp.eq.s32.totalorder %v279, 1
  %v284 = vsel %vm280, %v274, %v262
  %v285 = vsel %vm281, %v273, %v261
  %v286 = vsel %vm282, %v272, %v260
  %v287 = vsel %vm283, %v275, %v259
  %v288 = vsel %vm86, 1, 0
  %v289 = vsel %vm87, 1, 0
  %v290 = vsel %vm88, 1, 0
  %v291 = vsel %vm89, 1, 0
  %vm292 = vcmp.eq.s32.totalorder %v288, 1
  %vm293 = vcmp.eq.s32.totalorder %v289, 1
  %vm294 = vcmp.eq.s32.totalorder %v290, 1
  %vm295 = vcmp.eq.s32.totalorder %v291, 1
  %v296 = vsel %vm292, %v262, %v274
  %v297 = vsel %vm293, %v261, %v273
  %v298 = vsel %vm294, %v260, %v272
  %v299 = vsel %vm295, %v259, %v275
  %vm300 = vcmask 195584
  %v302 = vsel %vm300, %v18, 0
  %304 = vmatprep.subr.mxu0 0.0
  %305 = vmatpush1.msra.mxu0 0.0
  %306 = vmatprep.subr.mxu0 0.0
  %307 = vmatpush1.msra.mxu0 0.0
  %308 = vmatprep.subr.mxu0 0.0
  %309 = vmatpush1.msra.mxu0 0.0
  %310 = vmatprep.subr.mxu0 0.0
  %311 = vmatpush1.msra.mxu0 0.0
  %312 = vmatprep.subr.mxu0 0.0
  %313 = vmatpush1.msra.mxu0 0.0
  %314 = vmatprep.subr.mxu0 0.0
  %315 = vmatpush1.msra.mxu0 0.0
  %316 = vmatprep.subr.mxu0 0.0
  %317 = vmatpush1.msra.mxu0 0.0
  %318 = vmatprep.subr.mxu0 0.0
  %319 = vmatpush1.msra.mxu0 0.0
  %320 = vmatprep.subr.mxu0 0.0
  %321 = vmatpush1.msra.mxu0 0.0
  %322 = vmatprep.subr.mxu0 0.0
  %323 = vmatpush1.msra.mxu0 0.0
  %324 = vmatprep.subr.mxu0 0.0
  %325 = vmatpush1.msra.mxu0 0.0
  %326 = vmatprep.subr.mxu0 0.0
  %327 = vmatpush1.msra.mxu0 0.0
  %328 = vmatprep.subr.mxu0 0.0
  %329 = vmatpush1.msra.mxu0 0.0
  %330 = vmatprep.subr.mxu0 %v297
  %331 = vmatpush1.msra.mxu0 %v296
  %332 = vmatprep.subr.mxu0 %v177
  %333 = vmatpush1.msra.mxu0 %v175
  %334 = vmatprep.subr.mxu0 %v285
  %335 = vmatpush1.msra.mxu0 %v284
  %336 = vmatprep.subr.mxu0 0.0
  %337 = vmatpush2.msra.mxu0 0.0
  %338 = vmatprep.subr.mxu0 0.0
  %339 = vmatpush2.msra.mxu0 0.0
  %340 = vmatprep.subr.mxu0 0.0
  %341 = vmatpush2.msra.mxu0 0.0
  %342 = vmatprep.subr.mxu0 0.0
  %343 = vmatpush2.msra.mxu0 0.0
  %344 = vmatprep.subr.mxu0 0.0
  %345 = vmatpush2.msra.mxu0 0.0
  %346 = vmatprep.subr.mxu0 0.0
  %347 = vmatpush2.msra.mxu0 0.0
  %348 = vmatprep.subr.mxu0 0.0
  %349 = vmatpush2.msra.mxu0 0.0
  %350 = vmatprep.subr.mxu0 0.0
  %351 = vmatpush2.msra.mxu0 0.0
  %352 = vmatprep.subr.mxu0 0.0
  %353 = vmatpush2.msra.mxu0 0.0
  %354 = vmatprep.subr.mxu0 0.0
  %355 = vmatpush2.msra.mxu0 0.0
  %356 = vmatprep.subr.mxu0 0.0
  %357 = vmatpush2.msra.mxu0 0.0
  %358 = vmatprep.subr.mxu0 0.0
  %359 = vmatpush2.msra.mxu0 0.0
  %360 = vmatprep.subr.mxu0 0.0
  %361 = vmatpush2.msra.mxu0 0.0
  %362 = vmatprep.subr.mxu0 0.0
  %363 = vmatpush2.msra.mxu0 0.0
  %364 = vmatprep.subr.mxu0 0.0
  %365 = vmatpush2.msra.mxu0 0.0
  %366 = vmatprep.subr.mxu0 0.0
  %367 = vmatpush2.msra.mxu0 0.0
  %368 = vmatprep.mubr.f32.mxu0 0.0
  %369 = vmatmul.mubr.f32.gmra.mxu0 %v302
  %v370 = vpop.f32.mrf.mxu0
  %v371 = vadd.f32 0.0, %v370
  %v372 = vpop.f32.mrf.mxu0
  %v373 = vadd.f32 0.0, %v372
  %374 = vdwg.mxu0
  %375 = vmatprep.subr.mxu0 0.0
  %376 = vmatpush1.msra.mxu0 0.0
  %377 = vmatprep.subr.mxu0 0.0
  %378 = vmatpush1.msra.mxu0 0.0
  %379 = vmatprep.subr.mxu0 0.0
  %380 = vmatpush1.msra.mxu0 0.0
  %381 = vmatprep.subr.mxu0 0.0
  %382 = vmatpush1.msra.mxu0 0.0
  %383 = vmatprep.subr.mxu0 0.0
  %384 = vmatpush1.msra.mxu0 0.0
  %385 = vmatprep.subr.mxu0 0.0
  %386 = vmatpush1.msra.mxu0 0.0
  %387 = vmatprep.subr.mxu0 0.0
  %388 = vmatpush1.msra.mxu0 0.0
  %389 = vmatprep.subr.mxu0 0.0
  %390 = vmatpush1.msra.mxu0 0.0
  %391 = vmatprep.subr.mxu0 0.0
  %392 = vmatpush1.msra.mxu0 0.0
  %393 = vmatprep.subr.mxu0 0.0
  %394 = vmatpush1.msra.mxu0 0.0
  %395 = vmatprep.subr.mxu0 0.0
  %396 = vmatpush1.msra.mxu0 0.0
  %397 = vmatprep.subr.mxu0 0.0
  %398 = vmatpush1.msra.mxu0 0.0
  %399 = vmatprep.subr.mxu0 0.0
  %400 = vmatpush1.msra.mxu0 0.0
  %401 = vmatprep.subr.mxu0 %v299
  %402 = vmatpush1.msra.mxu0 %v298
  %403 = vmatprep.subr.mxu0 %v248
  %404 = vmatpush1.msra.mxu0 %v246
  %405 = vmatprep.subr.mxu0 %v287
  %406 = vmatpush1.msra.mxu0 %v286
  %407 = vmatprep.subr.mxu0 0.0
  %408 = vmatpush2.msra.mxu0 0.0
  %409 = vmatprep.subr.mxu0 0.0
  %410 = vmatpush2.msra.mxu0 0.0
  %411 = vmatprep.subr.mxu0 0.0
  %412 = vmatpush2.msra.mxu0 0.0
  %413 = vmatprep.subr.mxu0 0.0
  %414 = vmatpush2.msra.mxu0 0.0
  %415 = vmatprep.subr.mxu0 0.0
  %416 = vmatpush2.msra.mxu0 0.0
  %417 = vmatprep.subr.mxu0 0.0
  %418 = vmatpush2.msra.mxu0 0.0
  %419 = vmatprep.subr.mxu0 0.0
  %420 = vmatpush2.msra.mxu0 0.0
  %421 = vmatprep.subr.mxu0 0.0
  %422 = vmatpush2.msra.mxu0 0.0
  %423 = vmatprep.subr.mxu0 0.0
  %424 = vmatpush2.msra.mxu0 0.0
  %425 = vmatprep.subr.mxu0 0.0
  %426 = vmatpush2.msra.mxu0 0.0
  %427 = vmatprep.subr.mxu0 0.0
  %428 = vmatpush2.msra.mxu0 0.0
  %429 = vmatprep.subr.mxu0 0.0
  %430 = vmatpush2.msra.mxu0 0.0
  %431 = vmatprep.subr.mxu0 0.0
  %432 = vmatpush2.msra.mxu0 0.0
  %433 = vmatprep.subr.mxu0 0.0
  %434 = vmatpush2.msra.mxu0 0.0
  %435 = vmatprep.subr.mxu0 0.0
  %436 = vmatpush2.msra.mxu0 0.0
  %437 = vmatprep.subr.mxu0 0.0
  %438 = vmatpush2.msra.mxu0 0.0
  %439 = vmatprep.mubr.f32.mxu0 0.0
  %440 = vmatmul.mubr.f32.gmra.mxu0 %v302
  %v441 = vpop.f32.mrf.mxu0
  %v442 = vadd.f32 0.0, %v441
  %v443 = vpop.f32.mrf.mxu0
  %v444 = vadd.f32 0.0, %v443
  %445 = vdwg.mxu0
  %v446 = vadd.f32 %v371, %v373
  %v447 = vadd.f32 %v446, %v442
  %v448 = vadd.f32 %v447, %v444
  %449 = vadd.xlane.f32.xlu0 %v448
  %v450 = vpop.xlane.xlu0 %449
  %v451 = vmul.f32 %v450, 0.001953125
  %v452 = vsub.f32 %v371, %v451
  %v453 = vsub.f32 %v373, %v451
  %v454 = vsub.f32 %v442, %v451
  %v455 = vsub.f32 %v444, %v451
  %v456 = vmul.f32 %v452, %v452
  %v457 = vmul.f32 %v453, %v453
  %v458 = vmul.f32 %v454, %v454
  %v459 = vmul.f32 %v455, %v455
  %v460 = vadd.f32 %v456, %v457
  %v461 = vadd.f32 %v460, %v458
  %v462 = vadd.f32 %v461, %v459
  %463 = vadd.xlane.f32.xlu0 %v462
  %v464 = vpop.xlane.xlu0 %463
  %v465 = vmul.f32 %v464, 0.001953125
  %v466 = vadd.f32 %v465, 1e-05
  %v467 = vrsqrt.pop %v466
  %v468 = vmul.f32 %v21, %v467
  %470 = vset.pattern.permute.xlu0 1
  %471 = vperm.xlu0 %470, %v468
  %v472 = vpop.permute.xlu0 %471
  %v474 = vmul.f32 %v452, %v472
  %v475 = vmul.f32 %v453, %v472
  %v476 = vmul.f32 %v454, %v472
  %v477 = vmul.f32 %v455, %v472
  %478 = vset.pattern.permute.xlu0 2
  %479 = vperm.xlu0 %478, %v21
  %v480 = vpop.permute.xlu0 %479
  %v482 = vadd.f32 %v474, %v480
  %v483 = vadd.f32 %v475, %v480
  %v484 = vadd.f32 %v476, %v480
  %v485 = vadd.f32 %v477, %v480
  %v486 = vmax.f32 %v482, 0.0
  %v487 = vmax.f32 %v483, 0.0
  %v488 = vmax.f32 %v484, 0.0
  %v489 = vmax.f32 %v485, 0.0
  %490 = vrot.lane.b32.xlu0 %v486, 1
  %v491 = vpop.permute.xlu0 %490
  %492 = vrot.lane.b32.xlu0 %v487, 1
  %v493 = vpop.permute.xlu0 %492
  %494 = vrot.lane.b32.xlu0 %v488, 1
  %v495 = vpop.permute.xlu0 %494
  %496 = vrot.lane.b32.xlu0 %v489, 1
  %v497 = vpop.permute.xlu0 %496
  %v498 = vsel %vm258, %v495, %v497
  %v499 = vsel %vm258, %v493, %v495
  %v500 = vsel %vm258, %v491, %v493
  %v501 = vsel %vm258, %v497, %v491
  %502 = vrot.lane.b32.xlu0 %v486, 127
  %v503 = vpop.permute.xlu0 %502
  %504 = vrot.lane.b32.xlu0 %v487, 127
  %v505 = vpop.permute.xlu0 %504
  %506 = vrot.lane.b32.xlu0 %v488, 127
  %v507 = vpop.permute.xlu0 %506
  %508 = vrot.lane.b32.xlu0 %v489, 127
  %v509 = vpop.permute.xlu0 %508
  %v510 = vsel %vm271, %v507, %v509
  %v511 = vsel %vm271, %v505, %v507
  %v512 = vsel %vm271, %v503, %v505
  %v513 = vsel %vm271, %v509, %v503
  %v514 = vsel %vm280, %v512, %v501
  %v515 = vsel %vm281, %v511, %v500
  %v516 = vsel %vm282, %v510, %v499
  %v517 = vsel %vm283, %v513, %v498
  %v518 = vsel %vm292, %v501, %v512
  %v519 = vsel %vm293, %v500, %v511
  %v520 = vsel %vm294, %v499, %v510
  %v521 = vsel %vm295, %v498, %v513
  %v523 = vsel %vm300, %v20, 0
  %525 = vmatprep.subr.mxu0 0.0
  %526 = vmatpush1.msra.mxu0 0.0
  %527 = vmatprep.subr.mxu0 0.0
  %528 = vmatpush1.msra.mxu0 0.0
  %529 = vmatprep.subr.mxu0 0.0
  %530 = vmatpush1.msra.mxu0 0.0
  %531 = vmatprep.subr.mxu0 0.0
  %532 = vmatpush1.msra.mxu0 0.0
  %533 = vmatprep.subr.mxu0 0.0
  %534 = vmatpush1.msra.mxu0 0.0
  %535 = vmatprep.subr.mxu0 0.0
  %536 = vmatpush1.msra.mxu0 0.0
  %537 = vmatprep.subr.mxu0 0.0
  %538 = vmatpush1.msra.mxu0 0.0
  %539 = vmatprep.subr.mxu0 0.0
  %540 = vmatpush1.msra.mxu0 0.0
  %541 = vmatprep.subr.mxu0 0.0
  %542 = vmatpush1.msra.mxu0 0.0
  %543 = vmatprep.subr.mxu0 0.0
  %544 = vmatpush1.msra.mxu0 0.0
  %545 = vmatprep.subr.mxu0 0.0
  %546 = vmatpush1.msra.mxu0 0.0
  %547 = vmatprep.subr.mxu0 0.0
  %548 = vmatpush1.msra.mxu0 0.0
  %549 = vmatprep.subr.mxu0 0.0
  %550 = vmatpush1.msra.mxu0 0.0
  %551 = vmatprep.subr.mxu0 %v519
  %552 = vmatpush1.msra.mxu0 %v518
  %553 = vmatprep.subr.mxu0 %v487
  %554 = vmatpush1.msra.mxu0 %v486
  %555 = vmatprep.subr.mxu0 %v515
  %556 = vmatpush1.msra.mxu0 %v514
  %557 = vmatprep.subr.mxu0 0.0
  %558 = vmatpush2.msra.mxu0 0.0
  %559 = vmatprep.subr.mxu0 0.0
  %560 = vmatpush2.msra.mxu0 0.0
  %561 = vmatprep.subr.mxu0 0.0
  %562 = vmatpush2.msra.mxu0 0.0
  %563 = vmatprep.subr.mxu0 0.0
  %564 = vmatpush2.msra.mxu0 0.0
  %565 = vmatprep.subr.mxu0 0.0
  %566 = vmatpush2.msra.mxu0 0.0
  %567 = vmatprep.subr.mxu0 0.0
  %568 = vmatpush2.msra.mxu0 0.0
  %569 = vmatprep.subr.mxu0 0.0
  %570 = vmatpush2.msra.mxu0 0.0
  %571 = vmatprep.subr.mxu0 0.0
  %572 = vmatpush2.msra.mxu0 0.0
  %573 = vmatprep.subr.mxu0 0.0
  %574 = vmatpush2.msra.mxu0 0.0
  %575 = vmatprep.subr.mxu0 0.0
  %576 = vmatpush2.msra.mxu0 0.0
  %577 = vmatprep.subr.mxu0 0.0
  %578 = vmatpush2.msra.mxu0 0.0
  %579 = vmatprep.subr.mxu0 0.0
  %580 = vmatpush2.msra.mxu0 0.0
  %581 = vmatprep.subr.mxu0 0.0
  %582 = vmatpush2.msra.mxu0 0.0
  %583 = vmatprep.subr.mxu0 0.0
  %584 = vmatpush2.msra.mxu0 0.0
  %585 = vmatprep.subr.mxu0 0.0
  %586 = vmatpush2.msra.mxu0 0.0
  %587 = vmatprep.subr.mxu0 0.0
  %588 = vmatpush2.msra.mxu0 0.0
  %589 = vmatprep.mubr.f32.mxu0 0.0
  %590 = vmatmul.mubr.f32.gmra.mxu0 %v523
  %v591 = vpop.f32.mrf.mxu0
  %v592 = vadd.f32 0.0, %v591
  %v593 = vpop.f32.mrf.mxu0
  %v594 = vadd.f32 0.0, %v593
  %595 = vdwg.mxu0
  %596 = vmatprep.subr.mxu0 0.0
  %597 = vmatpush1.msra.mxu0 0.0
  %598 = vmatprep.subr.mxu0 0.0
  %599 = vmatpush1.msra.mxu0 0.0
  %600 = vmatprep.subr.mxu0 0.0
  %601 = vmatpush1.msra.mxu0 0.0
  %602 = vmatprep.subr.mxu0 0.0
  %603 = vmatpush1.msra.mxu0 0.0
  %604 = vmatprep.subr.mxu0 0.0
  %605 = vmatpush1.msra.mxu0 0.0
  %606 = vmatprep.subr.mxu0 0.0
  %607 = vmatpush1.msra.mxu0 0.0
  %608 = vmatprep.subr.mxu0 0.0
  %609 = vmatpush1.msra.mxu0 0.0
  %610 = vmatprep.subr.mxu0 0.0
  %611 = vmatpush1.msra.mxu0 0.0
  %612 = vmatprep.subr.mxu0 0.0
  %613 = vmatpush1.msra.mxu0 0.0
  %614 = vmatprep.subr.mxu0 0.0
  %615 = vmatpush1.msra.mxu0 0.0
  %616 = vmatprep.subr.mxu0 0.0
  %617 = vmatpush1.msra.mxu0 0.0
  %618 = vmatprep.subr.mxu0 0.0
  %619 = vmatpush1.msra.mxu0 0.0
  %620 = vmatprep.subr.mxu0 0.0
  %621 = vmatpush1.msra.mxu0 0.0
  %622 = vmatprep.subr.mxu0 %v521
  %623 = vmatpush1.msra.mxu0 %v520
  %624 = vmatprep.subr.mxu0 %v489
  %625 = vmatpush1.msra.mxu0 %v488
  %626 = vmatprep.subr.mxu0 %v517
  %627 = vmatpush1.msra.mxu0 %v516
  %628 = vmatprep.subr.mxu0 0.0
  %629 = vmatpush2.msra.mxu0 0.0
  %630 = vmatprep.subr.mxu0 0.0
  %631 = vmatpush2.msra.mxu0 0.0
  %632 = vmatprep.subr.mxu0 0.0
  %633 = vmatpush2.msra.mxu0 0.0
  %634 = vmatprep.subr.mxu0 0.0
  %635 = vmatpush2.msra.mxu0 0.0
  %636 = vmatprep.subr.mxu0 0.0
  %637 = vmatpush2.msra.mxu0 0.0
  %638 = vmatprep.subr.mxu0 0.0
  %639 = vmatpush2.msra.mxu0 0.0
  %640 = vmatprep.subr.mxu0 0.0
  %641 = vmatpush2.msra.mxu0 0.0
  %642 = vmatprep.subr.mxu0 0.0
  %643 = vmatpush2.msra.mxu0 0.0
  %644 = vmatprep.subr.mxu0 0.0
  %645 = vmatpush2.msra.mxu0 0.0
  %646 = vmatprep.subr.mxu0 0.0
  %647 = vmatpush2.msra.mxu0 0.0
  %648 = vmatprep.subr.mxu0 0.0
  %649 = vmatpush2.msra.mxu0 0.0
  %650 = vmatprep.subr.mxu0 0.0
  %651 = vmatpush2.msra.mxu0 0.0
  %652 = vmatprep.subr.mxu0 0.0
  %653 = vmatpush2.msra.mxu0 0.0
  %654 = vmatprep.subr.mxu0 0.0
  %655 = vmatpush2.msra.mxu0 0.0
  %656 = vmatprep.subr.mxu0 0.0
  %657 = vmatpush2.msra.mxu0 0.0
  %658 = vmatprep.subr.mxu0 0.0
  %659 = vmatpush2.msra.mxu0 0.0
  %660 = vmatprep.mubr.f32.mxu0 0.0
  %661 = vmatmul.mubr.f32.gmra.mxu0 %v523
  %v662 = vpop.f32.mrf.mxu0
  %v663 = vadd.f32 0.0, %v662
  %v664 = vpop.f32.mrf.mxu0
  %v665 = vadd.f32 0.0, %v664
  %666 = vdwg.mxu0
  %v667 = vadd.f32 %v592, %v594
  %v668 = vadd.f32 %v667, %v663
  %v669 = vadd.f32 %v668, %v665
  %670 = vadd.xlane.f32.xlu0 %v669
  %v671 = vpop.xlane.xlu0 %670
  %v672 = vmul.f32 %v671, 0.001953125
  %v673 = vsub.f32 %v592, %v672
  %v674 = vsub.f32 %v594, %v672
  %v675 = vsub.f32 %v663, %v672
  %v676 = vsub.f32 %v665, %v672
  %v677 = vmul.f32 %v673, %v673
  %v678 = vmul.f32 %v674, %v674
  %v679 = vmul.f32 %v675, %v675
  %v680 = vmul.f32 %v676, %v676
  %v681 = vadd.f32 %v677, %v678
  %v682 = vadd.f32 %v681, %v679
  %v683 = vadd.f32 %v682, %v680
  %684 = vadd.xlane.f32.xlu0 %v683
  %v685 = vpop.xlane.xlu0 %684
  %v686 = vmul.f32 %v685, 0.001953125
  %v687 = vadd.f32 %v686, 1e-05
  %v688 = vrsqrt.pop %v687
  %v689 = vmul.f32 %v21, %v688
  %691 = vset.pattern.permute.xlu0 3
  %692 = vperm.xlu0 %691, %v689
  %v693 = vpop.permute.xlu0 %692
  %v695 = vmul.f32 %v673, %v693
  %v696 = vmul.f32 %v674, %v693
  %v697 = vmul.f32 %v675, %v693
  %v698 = vmul.f32 %v676, %v693
  %699 = vset.pattern.permute.xlu0 4
  %700 = vperm.xlu0 %699, %v21
  %v701 = vpop.permute.xlu0 %700
  %v703 = vadd.f32 %v695, %v701
  %v704 = vadd.f32 %v696, %v701
  %v705 = vadd.f32 %v697, %v701
  %v706 = vadd.f32 %v698, %v701
  %v707 = vadd.f32 %v703, %v175
  %v708 = vadd.f32 %v704, %v177
  %v709 = vadd.f32 %v705, %v246
  %v710 = vadd.f32 %v706, %v248
  %711 = vst [vmem:[%s4] sm:$0xff] %v707
  %712 = vst [vmem:[%s4 + $0x8] sm:$0xff] %v708
  %s713 = scalar_lea.vmem %s4, 16
  %714 = vst [vmem:[%s713] sm:$0xff] %v709
  %715 = vst [vmem:[%s713 + $0x8] sm:$0xff] %v710
  // Predicated region
  $region18: #{sub_block_type_c.1} parent=0 // pred_check
    _
  $region19: #{sub_block_type_c.1} parent=0 // pred_check_branch
    %717 = sbr.rel (0) target = $region21
  $region20: #{sub_block_type_c.1} parent=0 // pred_region
    _
  $region21: #{sub_block_type_c.1} parent=0 // pred_fallthru
    _
  // Predicated region
  $region22: #{sub_block_type_c.1} parent=0 // pred_check
    _
  $region23: #{sub_block_type_c.1} parent=0 // pred_check_branch
    %719 = sbr.rel (0) target = $region25
  $region24: #{sub_block_type_c.1} parent=0 // pred_region
    _
  $region25: #{sub_block_type_c.1} parent=0 // pred_fallthru
    _

</llo_original>
